<compile_context>
chip_gen: v7x
topology: tpu7x:2x2x1
jax: 0.10.0
libtpu: 0.0.40
codegen_flags: <defaults>
</compile_context>

<pallas_src>
import jax
import jax.numpy as jnp
from jax.experimental import pallas as pl
from jax.experimental.pallas import tpu as pltpu

LANE = 128
SUBLANE = 8


def _round_up(n, m):
    return ((n + m - 1) // m) * m


def _pad_lane(n):
    return _round_up(max(n, 1), LANE)


# ----------------------------- fused Pallas kernel ---------------------------

def _make_fused_kernel(n_enc, n_dec, z_pad):
    """Single fused whole-forward kernel.

    Ref order: x, eps,
               (w, b) * n_enc   encoder hidden layers (ReLU)
               (w, b)           merged e2|e3 -> [mean | log_var]
               (w, b) * n_dec   decoder hidden layers (ReLU)
               (w, b)           d5 output layer
               out_ref, ml_ref  outputs
    """
    n_in = 2 + 2 * (n_enc + 1 + n_dec + 1)

    def kernel(*refs):
        it = iter(refs[:n_in])
        out_ref, ml_ref = refs[n_in], refs[n_in + 1]

        x = next(it)[...]
        eps = next(it)[...]

        # encoder hidden stack (fused matmul + bias + ReLU, all VMEM-resident)
        h = x
        for _ in range(n_enc):
            w = next(it)[...]
            b = next(it)[...]
            h = jnp.maximum(
                jnp.dot(h, w, preferred_element_type=jnp.float32) + b, 0.0)

        # merged e2|e3: one matmul -> [mean | log_var] in 128-aligned blocks
        w = next(it)[...]
        b = next(it)[...]
        ml = jnp.dot(h, w, preferred_element_type=jnp.float32) + b
        ml_ref[...] = ml.astype(ml_ref.dtype)

        mean = ml[:, :z_pad]
        log_var = ml[:, z_pad:]

        # reparameterize: z = mean + exp(0.5 * log_var) * eps  (VPU/EUP)
        z = mean + jnp.exp(0.5 * log_var) * eps

        # decoder hidden stack
        o = z
        for _ in range(n_dec):
            w = next(it)[...]
            b = next(it)[...]
            o = jnp.maximum(
                jnp.dot(o, w, preferred_element_type=jnp.float32) + b, 0.0)

        # d5 output layer
        w = next(it)[...]
        b = next(it)[...]
        o = jnp.dot(o, w, preferred_element_type=jnp.float32) + b
        out_ref[...] = o.astype(out_ref.dtype)

    return kernel


# ----------------------------- params + model --------------------------------

def _init_linear(key, fan_in, fan_out):
    """PyTorch-style uniform init: U(-1/sqrt(fan_in), 1/sqrt(fan_in))."""
    kw, kb = jax.random.split(key)
    bound = 1.0 / jnp.sqrt(jnp.float32(fan_in))
    w = jax.random.uniform(kw, (fan_in, fan_out), jnp.float32, -bound, bound)
    b = jax.random.uniform(kb, (fan_out,), jnp.float32, -bound, bound)
    return w, b


def _pad_linear(w, b, in_pad, out_pad):
    wp = jnp.zeros((in_pad, out_pad), jnp.float32)
    wp = wp.at[:w.shape[0], :w.shape[1]].set(w)
    bp = jnp.zeros((1, out_pad), jnp.float32)
    bp = bp.at[0, :b.shape[0]].set(b)
    return wp, bp


class Model:
    def __init__(self, para_dim, z_dim, h_dim, key):
        self.para_dim, self.z_dim, self.h_dim = para_dim, z_dim, list(h_dim)
        keys = iter(jax.random.split(key, 2 * len(h_dim) + 4))

        # raw (unpadded) parameters, (in, out) layout
        dims = [para_dim] + list(h_dim)
        self.e1 = [_init_linear(next(keys), dims[i], dims[i + 1])
                   for i in range(len(h_dim))]
        self.e2 = _init_linear(next(keys), h_dim[-1], z_dim)
        self.e3 = _init_linear(next(keys), h_dim[-1], z_dim)
        ddims = [z_dim] + list(reversed(h_dim))
        self.d4 = [_init_linear(next(keys), ddims[i], ddims[i + 1])
                   for i in range(len(h_dim))]
        self.d5 = _init_linear(next(keys), h_dim[0], para_dim)

        # lane-padded parameters, flattened in kernel consumption order
        self.para_pad = _pad_lane(para_dim)
        self.z_pad = _pad_lane(z_dim)
        h_pads = [_pad_lane(h) for h in h_dim]

        flat = []
        e_in_pads = [self.para_pad] + h_pads
        for (w, b), ip, op in zip(self.e1, e_in_pads[:-1], h_pads):
            flat.extend(_pad_linear(w, b, ip, op))

        # merged e2|e3: cols [0:z_dim] = e2, cols [z_pad:z_pad+z_dim] = e3
        hlp = h_pads[-1]
        w23 = jnp.zeros((hlp, 2 * self.z_pad), jnp.float32)
        w23 = w23.at[:h_dim[-1], :z_dim].set(self.e2[0])
        w23 = w23.at[:h_dim[-1], self.z_pad:self.z_pad + z_dim].set(self.e3[0])
        b23 = jnp.zeros((1, 2 * self.z_pad), jnp.float32)
        b23 = b23.at[0, :z_dim].set(self.e2[1])
        b23 = b23.at[0, self.z_pad:self.z_pad + z_dim].set(self.e3[1])
        flat.extend([w23, b23])

        d_in_pads = [self.z_pad] + list(reversed(h_pads))
        d_out_pads = list(reversed(h_pads))
        for (w, b), ip, op in zip(self.d4, d_in_pads[:-1], d_out_pads):
            flat.extend(_pad_linear(w, b, ip, op))
        flat.extend(_pad_linear(*self.d5, h_pads[0], self.para_pad))

        self.flat_params = flat
        self._kernel = _make_fused_kernel(len(h_dim), len(h_dim), self.z_pad)
        self._fwd = jax.jit(self._forward_impl)

    def _forward_impl(self, x, eps, flat_params):
        B = x.shape[0]
        b_pad = _round_up(B, SUBLANE)
        x_p = jnp.zeros((b_pad, self.para_pad), jnp.float32)
        x_p = x_p.at[:B, :self.para_dim].set(x)
        eps_p = jnp.zeros((b_pad, self.z_pad), jnp.float32)
        eps_p = eps_p.at[:B, :self.z_dim].set(eps)

        vmem = pl.BlockSpec(memory_space=pltpu.MemorySpace.VMEM)
        out_p, ml_p = pl.pallas_call(
            self._kernel,
            out_shape=(
                jax.ShapeDtypeStruct((b_pad, self.para_pad), jnp.float32),
                jax.ShapeDtypeStruct((b_pad, 2 * self.z_pad), jnp.float32),
            ),
            in_specs=[vmem] * (2 + len(flat_params)),
            out_specs=(vmem, vmem),
        )(x_p, eps_p, *flat_params)

        out = out_p[:B, :self.para_dim]
        mean = ml_p[:B, :self.z_dim]
        log_var = ml_p[:B, self.z_pad:self.z_pad + self.z_dim]
        return out, mean, log_var

    def forward(self, x, eps):
        # single fused pallas_call per forward; weights DMA'd once into VMEM
        return self._fwd(x, eps, self.flat_params)


# ----------------------------- main -------------------------------------------

if __name__ == "__main__":
    key = jax.random.PRNGKey(0)
    k_param, k_x, k_eps = jax.random.split(key, 3)

    # small synthetic shapes consistent with the module's MLP structure
    para_dim, z_dim, h_dim = 32, 16, [64, 48]
    batch = 8

    model = Model(para_dim, z_dim, h_dim, k_param)
    x = jax.random.normal(k_x, (batch, para_dim), jnp.float32)
    eps = jax.random.normal(k_eps, (batch, z_dim), jnp.float32)

    out, mean, log_var = model.forward(x, eps)
    jax.block_until_ready((out, mean, log_var))

    # pure-JAX reference with the unpadded parameters (same eps)
    def ref_forward(x, eps):
        h = x
        for (w, b) in model.e1:
            h = jnp.maximum(h @ w + b, 0.0)
        mean_r = h @ model.e2[0] + model.e2[1]
        log_var_r = h @ model.e3[0] + model.e3[1]
        z = mean_r + jnp.exp(0.5 * log_var_r) * eps
        o = z
        for (w, b) in model.d4:
            o = jnp.maximum(o @ w + b, 0.0)
        o = o @ model.d5[0] + model.d5[1]
        return o, mean_r, log_var_r

    out_r, mean_r, log_var_r = ref_forward(x, eps)
    assert out.shape == (batch, para_dim)
    assert mean.shape == (batch, z_dim) and log_var.shape == (batch, z_dim)
    assert jnp.allclose(out, out_r, atol=1e-4, rtol=1e-4)
    assert jnp.allclose(mean, mean_r, atol=1e-5, rtol=1e-5)
    assert jnp.allclose(log_var, log_var_r, atol=1e-5, rtol=1e-5)

    print("KERNEL_OK")
</pallas_src>

<mosaic_0001>
module attributes {stable_mosaic.version = 11 : i64} {
  func.func @kernel(%arg0: memref<8x128xf32, #tpu.memory_space<vmem>>, %arg1: memref<8x128xf32, #tpu.memory_space<vmem>>, %arg2: memref<128x128xf32, #tpu.memory_space<vmem>>, %arg3: memref<1x128xf32, #tpu.memory_space<vmem>>, %arg4: memref<128x128xf32, #tpu.memory_space<vmem>>, %arg5: memref<1x128xf32, #tpu.memory_space<vmem>>, %arg6: memref<128x256xf32, #tpu.memory_space<vmem>>, %arg7: memref<1x256xf32, #tpu.memory_space<vmem>>, %arg8: memref<128x128xf32, #tpu.memory_space<vmem>>, %arg9: memref<1x128xf32, #tpu.memory_space<vmem>>, %arg10: memref<128x128xf32, #tpu.memory_space<vmem>>, %arg11: memref<1x128xf32, #tpu.memory_space<vmem>>, %arg12: memref<128x128xf32, #tpu.memory_space<vmem>>, %arg13: memref<1x128xf32, #tpu.memory_space<vmem>>, %arg14: memref<8x128xf32, #tpu.memory_space<vmem>>, %arg15: memref<8x256xf32, #tpu.memory_space<vmem>>) attributes {dimension_semantics = [], scalar_prefetch = 0 : i64, scratch_operands = 0 : i64, tpu.core_type = #tpu.core_type<tc>} {
    %c0 = arith.constant 0 : index
    %c0_0 = arith.constant 0 : index
    %0 = vector.load %arg0[%c0, %c0_0] : memref<8x128xf32, #tpu.memory_space<vmem>>, vector<8x128xf32>
    %c0_1 = arith.constant 0 : index
    %c0_2 = arith.constant 0 : index
    %1 = vector.load %arg1[%c0_1, %c0_2] : memref<8x128xf32, #tpu.memory_space<vmem>>, vector<8x128xf32>
    %c0_3 = arith.constant 0 : index
    %c0_4 = arith.constant 0 : index
    %2 = vector.load %arg2[%c0_3, %c0_4] : memref<128x128xf32, #tpu.memory_space<vmem>>, vector<128x128xf32>
    %c0_5 = arith.constant 0 : index
    %c0_6 = arith.constant 0 : index
    %3 = vector.load %arg3[%c0_5, %c0_6] : memref<1x128xf32, #tpu.memory_space<vmem>>, vector<1x128xf32>
    %cst = arith.constant dense<0.000000e+00> : vector<8x128xf32>
    %4 = tpu.matmul %0, %2, %cst {dimension_numbers = #tpu.dot_dimension_numbers<[1], [0], [0], [1], [0, 0, 1, 1], [], []>} : vector<8x128xf32>, vector<128x128xf32>, vector<8x128xf32> -> vector<8x128xf32>
    %5 = vector.broadcast %3 : vector<1x128xf32> to vector<8x128xf32>
    %6 = arith.addf %4, %5 : vector<8x128xf32>
    %cst_7 = arith.constant 0.000000e+00 : f32
    %7 = vector.broadcast %cst_7 : f32 to vector<8x128xf32>
    %8 = arith.maximumf %6, %7 : vector<8x128xf32>
    %c0_8 = arith.constant 0 : index
    %c0_9 = arith.constant 0 : index
    %9 = vector.load %arg4[%c0_8, %c0_9] : memref<128x128xf32, #tpu.memory_space<vmem>>, vector<128x128xf32>
    %c0_10 = arith.constant 0 : index
    %c0_11 = arith.constant 0 : index
    %10 = vector.load %arg5[%c0_10, %c0_11] : memref<1x128xf32, #tpu.memory_space<vmem>>, vector<1x128xf32>
    %cst_12 = arith.constant dense<0.000000e+00> : vector<8x128xf32>
    %11 = tpu.matmul %8, %9, %cst_12 {dimension_numbers = #tpu.dot_dimension_numbers<[1], [0], [0], [1], [0, 0, 1, 1], [], []>} : vector<8x128xf32>, vector<128x128xf32>, vector<8x128xf32> -> vector<8x128xf32>
    %12 = vector.broadcast %10 : vector<1x128xf32> to vector<8x128xf32>
    %13 = arith.addf %11, %12 : vector<8x128xf32>
    %cst_13 = arith.constant 0.000000e+00 : f32
    %14 = vector.broadcast %cst_13 : f32 to vector<8x128xf32>
    %15 = arith.maximumf %13, %14 : vector<8x128xf32>
    %c0_14 = arith.constant 0 : index
    %c0_15 = arith.constant 0 : index
    %16 = vector.load %arg6[%c0_14, %c0_15] : memref<128x256xf32, #tpu.memory_space<vmem>>, vector<128x256xf32>
    %c0_16 = arith.constant 0 : index
    %c0_17 = arith.constant 0 : index
    %17 = vector.load %arg7[%c0_16, %c0_17] : memref<1x256xf32, #tpu.memory_space<vmem>>, vector<1x256xf32>
    %cst_18 = arith.constant dense<0.000000e+00> : vector<8x256xf32>
    %18 = tpu.matmul %15, %16, %cst_18 {dimension_numbers = #tpu.dot_dimension_numbers<[1], [0], [0], [1], [0, 0, 1, 1], [], []>} : vector<8x128xf32>, vector<128x256xf32>, vector<8x256xf32> -> vector<8x256xf32>
    %19 = vector.broadcast %17 : vector<1x256xf32> to vector<8x256xf32>
    %20 = arith.addf %18, %19 : vector<8x256xf32>
    %c0_19 = arith.constant 0 : index
    %c0_20 = arith.constant 0 : index
    %21 = vector.load %arg15[%c0_19, %c0_20] : memref<8x256xf32, #tpu.memory_space<vmem>>, vector<8x256xf32>
    tpu.vector_store %arg15[%c0_19, %c0_20], %20 {strides = array<i32>} : memref<8x256xf32, #tpu.memory_space<vmem>>, vector<8x256xf32>,
    %22 = vector.extract_strided_slice %20 {offsets = [0, 0], sizes = [8, 128], strides = [1, 1]} : vector<8x256xf32> to vector<8x128xf32>
    %23 = vector.extract_strided_slice %20 {offsets = [0, 128], sizes = [8, 128], strides = [1, 1]} : vector<8x256xf32> to vector<8x128xf32>
    %cst_21 = arith.constant 5.000000e-01 : f32
    %24 = vector.broadcast %cst_21 : f32 to vector<8x128xf32>
    %25 = arith.mulf %24, %23 : vector<8x128xf32>
    %26 = math.exp %25 : vector<8x128xf32>
    %27 = arith.mulf %26, %1 : vector<8x128xf32>
    %28 = arith.addf %22, %27 : vector<8x128xf32>
    %c0_22 = arith.constant 0 : index
    %c0_23 = arith.constant 0 : index
    %29 = vector.load %arg8[%c0_22, %c0_23] : memref<128x128xf32, #tpu.memory_space<vmem>>, vector<128x128xf32>
    %c0_24 = arith.constant 0 : index
    %c0_25 = arith.constant 0 : index
    %30 = vector.load %arg9[%c0_24, %c0_25] : memref<1x128xf32, #tpu.memory_space<vmem>>, vector<1x128xf32>
    %cst_26 = arith.constant dense<0.000000e+00> : vector<8x128xf32>
    %31 = tpu.matmul %28, %29, %cst_26 {dimension_numbers = #tpu.dot_dimension_numbers<[1], [0], [0], [1], [0, 0, 1, 1], [], []>} : vector<8x128xf32>, vector<128x128xf32>, vector<8x128xf32> -> vector<8x128xf32>
    %32 = vector.broadcast %30 : vector<1x128xf32> to vector<8x128xf32>
    %33 = arith.addf %31, %32 : vector<8x128xf32>
    %cst_27 = arith.constant 0.000000e+00 : f32
    %34 = vector.broadcast %cst_27 : f32 to vector<8x128xf32>
    %35 = arith.maximumf %33, %34 : vector<8x128xf32>
    %c0_28 = arith.constant 0 : index
    %c0_29 = arith.constant 0 : index
    %36 = vector.load %arg10[%c0_28, %c0_29] : memref<128x128xf32, #tpu.memory_space<vmem>>, vector<128x128xf32>
    %c0_30 = arith.constant 0 : index
    %c0_31 = arith.constant 0 : index
    %37 = vector.load %arg11[%c0_30, %c0_31] : memref<1x128xf32, #tpu.memory_space<vmem>>, vector<1x128xf32>
    %cst_32 = arith.constant dense<0.000000e+00> : vector<8x128xf32>
    %38 = tpu.matmul %35, %36, %cst_32 {dimension_numbers = #tpu.dot_dimension_numbers<[1], [0], [0], [1], [0, 0, 1, 1], [], []>} : vector<8x128xf32>, vector<128x128xf32>, vector<8x128xf32> -> vector<8x128xf32>
    %39 = vector.broadcast %37 : vector<1x128xf32> to vector<8x128xf32>
    %40 = arith.addf %38, %39 : vector<8x128xf32>
    %cst_33 = arith.constant 0.000000e+00 : f32
    %41 = vector.broadcast %cst_33 : f32 to vector<8x128xf32>
    %42 = arith.maximumf %40, %41 : vector<8x128xf32>
    %c0_34 = arith.constant 0 : index
    %c0_35 = arith.constant 0 : index
    %43 = vector.load %arg12[%c0_34, %c0_35] : memref<128x128xf32, #tpu.memory_space<vmem>>, vector<128x128xf32>
    %c0_36 = arith.constant 0 : index
    %c0_37 = arith.constant 0 : index
    %44 = vector.load %arg13[%c0_36, %c0_37] : memref<1x128xf32, #tpu.memory_space<vmem>>, vector<1x128xf32>
    %cst_38 = arith.constant dense<0.000000e+00> : vector<8x128xf32>
    %45 = tpu.matmul %42, %43, %cst_38 {dimension_numbers = #tpu.dot_dimension_numbers<[1], [0], [0], [1], [0, 0, 1, 1], [], []>} : vector<8x128xf32>, vector<128x128xf32>, vector<8x128xf32> -> vector<8x128xf32>
    %46 = vector.broadcast %44 : vector<1x128xf32> to vector<8x128xf32>
    %47 = arith.addf %45, %46 : vector<8x128xf32>
    %c0_39 = arith.constant 0 : index
    %c0_40 = arith.constant 0 : index
    %48 = vector.load %arg14[%c0_39, %c0_40] : memref<8x128xf32, #tpu.memory_space<vmem>>, vector<8x128xf32>
    tpu.vector_store %arg14[%c0_39, %c0_40], %47 {strides = array<i32>} : memref<8x128xf32, #tpu.memory_space<vmem>>, vector<8x128xf32>,
    return
  }
}

</mosaic_0001>

<llo_original>
// kernel: _forward_impl.1
$region0: #{_forward_impl.1}
  #allocation0 [shape = 'u32[]', space=smem, size = 0x4, offset = 0x4, fixed_abs, tag = 'smem constant byte address 0x4 - core index']
  #allocation1 [shape = 'u32[144,128]{1,0:T(1,128)}', space=vmem, size = 0x12000, scoped, tag = 'internal scratch']
  %s0 = inlined_call_operand.vmem [shape: f32[8,128], index: 0, kind: input, shape index: {}]
  %s1 = inlined_call_operand.vmem [shape: f32[8,128], index: 1, kind: input, shape index: {}]
  %s2 = inlined_call_operand.hbm [shape: f32[128,128], index: 2, kind: input, shape index: {}]
  %s3 = inlined_call_operand.vmem [shape: f32[1,128], index: 3, kind: input, shape index: {}]
  %s4 = inlined_call_operand.hbm [shape: f32[128,128], index: 4, kind: input, shape index: {}]
  %s5 = inlined_call_operand.vmem [shape: f32[1,128], index: 5, kind: input, shape index: {}]
  %s6 = inlined_call_operand.hbm [shape: f32[128,256], index: 6, kind: input, shape index: {}]
  %s7 = inlined_call_operand.vmem [shape: f32[1,256], index: 7, kind: input, shape index: {}]
  %s8 = inlined_call_operand.hbm [shape: f32[128,128], index: 8, kind: input, shape index: {}]
  %s9 = inlined_call_operand.vmem [shape: f32[1,128], index: 9, kind: input, shape index: {}]
  %s10 = inlined_call_operand.hbm [shape: f32[128,128], index: 10, kind: input, shape index: {}]
  %s11 = inlined_call_operand.vmem [shape: f32[1,128], index: 11, kind: input, shape index: {}]
  %s12 = inlined_call_operand.hbm [shape: f32[128,128], index: 12, kind: input, shape index: {}]
  %s13 = inlined_call_operand.vmem [shape: f32[1,128], index: 13, kind: input, shape index: {}]
  %s14 = inlined_call_operand.hbm [shape: f32[8,128], index: 14, kind: output, shape index: {0}]
  %s15 = inlined_call_operand.vmem [shape: f32[8,256], index: 15, kind: output, shape index: {1}]
  %16 = xla_tuple %s14, %s15
  %s17 = sld [smem:[#allocation0]]
  $region98: #{_forward_impl.1} parent=0
    _
  %s19 = ssub.s32 1, %s17
  %s20 = scalar_select 0, %s19, %s17
  $region1: #{_forward_impl.1} parent=0
    #allocation2 [shape = 'u8[65536]{0}', space=vmem, size = 0x10000, scoped, tag = 'input window, operand 2, single buffered']
    #allocation3 [shape = 's32[1]{0}', space=sflag, size = 0x4, scoped, tag = 'scoped memory for _forward_impl.1']
    #allocation4 [shape = 's32[1]{0}', space=sflag, size = 0x4, scoped, tag = 'scoped memory for _forward_impl.1']
    #allocation5 [shape = 'u8[65536]{0}', space=vmem, size = 0x10000, scoped, tag = 'input window, operand 4, single buffered']
    #allocation6 [shape = 's32[1]{0}', space=sflag, size = 0x4, scoped, tag = 'scoped memory for _forward_impl.1']
    #allocation7 [shape = 'u8[131072]{0}', space=vmem, size = 0x20000, scoped, tag = 'input window, operand 6, single buffered']
    #allocation8 [shape = 'u8[65536]{0}', space=vmem, size = 0x10000, scoped, tag = 'input window, operand 8, single buffered']
    #allocation9 [shape = 's32[1]{0}', space=sflag, size = 0x4, scoped, tag = 'scoped memory for _forward_impl.1']
    #allocation10 [shape = 'u8[65536]{0}', space=vmem, size = 0x10000, scoped, tag = 'input window, operand 10, single buffered']
    #allocation11 [shape = 'u8[65536]{0}', space=vmem, size = 0x10000, scoped, tag = 'input window, operand 12, single buffered']
    #allocation12 [shape = 's32[1]{0}', space=sflag, size = 0x4, scoped, tag = 'scoped memory for _forward_impl.1']
    #allocation13 [shape = 'u8[4096]{0}', space=vmem, size = 0x1000, scoped, tag = 'output window, operand 0, single buffered']
    %21 = vsyncpa [#allocation3], 0
    %22 = vsyncpa [#allocation6], 0
    %23 = vsyncpa [#allocation9], 0
    %24 = vsyncpa [#allocation12], 0
    %25 = vsyncpa [#allocation4], 0
    // Predicated region
    $region2: #{_forward_impl.1} parent=1 // pred_check
      _
    $region3: #{_forward_impl.1} parent=1 // pred_check_branch
      %27 = sbr.rel (0) target = $region5
    $region4: #{_forward_impl.1} parent=1 // pred_region
      _
    $region5: #{_forward_impl.1} parent=1 // pred_fallthru
      _
    // Predicated region
    $region6: #{_forward_impl.1} parent=1 // pred_check
      _
    $region7: #{_forward_impl.1} parent=1 // pred_check_branch
      %29 = sbr.rel (0) target = $region9
    $region8: #{_forward_impl.1} parent=1 // pred_region
      _
    $region9: #{_forward_impl.1} parent=1 // pred_fallthru
      _
    // Predicated region
    $region10: #{_forward_impl.1} parent=1 // pred_check
      _
    $region11: #{_forward_impl.1} parent=1 // pred_check_branch
      %31 = sbr.rel (0) target = $region13
    $region12: #{_forward_impl.1} parent=1 // pred_region
      %s33 = ssub.s32 2048, 2048
      %34 = vsyncadd [#allocation3], %s33
      %s35 = sshll.u32 [#allocation2], 4
      %s36 = int_to_ptr.vmem [resolvable:$true] %s35
      %41 = dma.hbm_to_vmem [thread:$0]  %s2, 2048, %s36, [#allocation3], 128, 128, 8
    $region13: #{_forward_impl.1} parent=1 // pred_fallthru
      _
    // Predicated region
    $region14: #{_forward_impl.1} parent=1 // pred_check
      _
    $region15: #{_forward_impl.1} parent=1 // pred_check_branch
      %43 = sbr.rel (0) target = $region17
    $region16: #{_forward_impl.1} parent=1 // pred_region
      _
    $region17: #{_forward_impl.1} parent=1 // pred_fallthru
      _
    // Predicated region
    $region18: #{_forward_impl.1} parent=1 // pred_check
      _
    $region19: #{_forward_impl.1} parent=1 // pred_check_branch
      %45 = sbr.rel (0) target = $region21
    $region20: #{_forward_impl.1} parent=1 // pred_region
      %s47 = ssub.s32 2048, 2048
      %48 = vsyncadd [#allocation6], %s47
      %s49 = sshll.u32 [#allocation5], 4
      %s50 = int_to_ptr.vmem [resolvable:$true] %s49
      %55 = dma.hbm_to_vmem [thread:$0]  %s4, 2048, %s50, [#allocation6], 128, 128, 8
    $region21: #{_forward_impl.1} parent=1 // pred_fallthru
      _
    // Predicated region
    $region22: #{_forward_impl.1} parent=1 // pred_check
      _
    $region23: #{_forward_impl.1} parent=1 // pred_check_branch
      %57 = sbr.rel (0) target = $region25
    $region24: #{_forward_impl.1} parent=1 // pred_region
      _
    $region25: #{_forward_impl.1} parent=1 // pred_fallthru
      _
    // Predicated region
    $region26: #{_forward_impl.1} parent=1 // pred_check
      _
    $region27: #{_forward_impl.1} parent=1 // pred_check_branch
      %59 = sbr.rel (0) target = $region29
    $region28: #{_forward_impl.1} parent=1 // pred_region
      %s61 = ssub.s32 4096, 4096
      %62 = vsyncadd [#allocation6], %s61
      %s63 = sshll.u32 [#allocation7], 4
      %s64 = int_to_ptr.vmem [resolvable:$true] %s63
      %69 = dma.hbm_to_vmem [thread:$0]  %s6, 4096, %s64, [#allocation6], 256, 256, 16
    $region29: #{_forward_impl.1} parent=1 // pred_fallthru
      _
    // Predicated region
    $region30: #{_forward_impl.1} parent=1 // pred_check
      _
    $region31: #{_forward_impl.1} parent=1 // pred_check_branch
      %71 = sbr.rel (0) target = $region33
    $region32: #{_forward_impl.1} parent=1 // pred_region
      _
    $region33: #{_forward_impl.1} parent=1 // pred_fallthru
      _
    // Predicated region
    $region34: #{_forward_impl.1} parent=1 // pred_check
      _
    $region35: #{_forward_impl.1} parent=1 // pred_check_branch
      %73 = sbr.rel (0) target = $region37
    $region36: #{_forward_impl.1} parent=1 // pred_region
      %s75 = ssub.s32 2048, 2048
      %76 = vsyncadd [#allocation9], %s75
      %s77 = sshll.u32 [#allocation8], 4
      %s78 = int_to_ptr.vmem [resolvable:$true] %s77
      %83 = dma.hbm_to_vmem [thread:$0]  %s8, 2048, %s78, [#allocation9], 128, 128, 8
    $region37: #{_forward_impl.1} parent=1 // pred_fallthru
      _
    // Predicated region
    $region38: #{_forward_impl.1} parent=1 // pred_check
      _
    $region39: #{_forward_impl.1} parent=1 // pred_check_branch
      %85 = sbr.rel (0) target = $region41
    $region40: #{_forward_impl.1} parent=1 // pred_region
      _
    $region41: #{_forward_impl.1} parent=1 // pred_fallthru
      _
    // Predicated region
    $region42: #{_forward_impl.1} parent=1 // pred_check
      _
    $region43: #{_forward_impl.1} parent=1 // pred_check_branch
      %87 = sbr.rel (0) target = $region45
    $region44: #{_forward_impl.1} parent=1 // pred_region
      %s89 = ssub.s32 2048, 2048
      %90 = vsyncadd [#allocation9], %s89
      %s91 = sshll.u32 [#allocation10], 4
      %s92 = int_to_ptr.vmem [resolvable:$true] %s91
      %97 = dma.hbm_to_vmem [thread:$0]  %s10, 2048, %s92, [#allocation9], 128, 128, 8
    $region45: #{_forward_impl.1} parent=1 // pred_fallthru
      _
    // Predicated region
    $region46: #{_forward_impl.1} parent=1 // pred_check
      _
    $region47: #{_forward_impl.1} parent=1 // pred_check_branch
      %99 = sbr.rel (0) target = $region49
    $region48: #{_forward_impl.1} parent=1 // pred_region
      _
    $region49: #{_forward_impl.1} parent=1 // pred_fallthru
      _
    // Predicated region
    $region50: #{_forward_impl.1} parent=1 // pred_check
      _
    $region51: #{_forward_impl.1} parent=1 // pred_check_branch
      %101 = sbr.rel (0) target = $region53
    $region52: #{_forward_impl.1} parent=1 // pred_region
      %s103 = ssub.s32 2048, 2048
      %104 = vsyncadd [#allocation12], %s103
      %s105 = sshll.u32 [#allocation11], 4
      %s106 = int_to_ptr.vmem [resolvable:$true] %s105
      %111 = dma.hbm_to_vmem [thread:$0]  %s12, 2048, %s106, [#allocation12], 128, 128, 8
    $region53: #{_forward_impl.1} parent=1 // pred_fallthru
      _
    // Predicated region
    $region54: #{_forward_impl.1} parent=1 // pred_check
      _
    $region55: #{_forward_impl.1} parent=1 // pred_check_branch
      %113 = sbr.rel (0) target = $region57
    $region56: #{_forward_impl.1} parent=1 // pred_region
      _
    $region57: #{_forward_impl.1} parent=1 // pred_fallthru
      _
    // Predicated region
    $region58: #{_forward_impl.1} parent=1 // pred_check
      _
    $region59: #{_forward_impl.1} parent=1 // pred_check_branch
      %115 = sbr.rel (0) target = $region61
    $region60: #{_forward_impl.1} parent=1 // pred_region
      %116 = dma.done [#allocation3], 2048
    $region61: #{_forward_impl.1} parent=1 // pred_fallthru
      _
    // Predicated region
    $region62: #{_forward_impl.1} parent=1 // pred_check
      _
    $region63: #{_forward_impl.1} parent=1 // pred_check_branch
      %118 = sbr.rel (0) target = $region65
    $region64: #{_forward_impl.1} parent=1 // pred_region
      %119 = dma.done [#allocation6], 2048
    $region65: #{_forward_impl.1} parent=1 // pred_fallthru
      _
    // Predicated region
    $region66: #{_forward_impl.1} parent=1 // pred_check
      _
    $region67: #{_forward_impl.1} parent=1 // pred_check_branch
      %121 = sbr.rel (0) target = $region69
    $region68: #{_forward_impl.1} parent=1 // pred_region
      %122 = dma.done [#allocation6], 4096
    $region69: #{_forward_impl.1} parent=1 // pred_fallthru
      _
    // Predicated region
    $region70: #{_forward_impl.1} parent=1 // pred_check
      _
    $region71: #{_forward_impl.1} parent=1 // pred_check_branch
      %124 = sbr.rel (0) target = $region73
    $region72: #{_forward_impl.1} parent=1 // pred_region
      %125 = dma.done [#allocation9], 2048
    $region73: #{_forward_impl.1} parent=1 // pred_fallthru
      _
    // Predicated region
    $region74: #{_forward_impl.1} parent=1 // pred_check
      _
    $region75: #{_forward_impl.1} parent=1 // pred_check_branch
      %127 = sbr.rel (0) target = $region77
    $region76: #{_forward_impl.1} parent=1 // pred_region
      %128 = dma.done [#allocation9], 2048
    $region77: #{_forward_impl.1} parent=1 // pred_fallthru
      _
    // Predicated region
    $region78: #{_forward_impl.1} parent=1 // pred_check
      _
    $region79: #{_forward_impl.1} parent=1 // pred_check_branch
      %130 = sbr.rel (0) target = $region81
    $region80: #{_forward_impl.1} parent=1 // pred_region
      %131 = dma.done [#allocation12], 2048
    $region81: #{_forward_impl.1} parent=1 // pred_fallthru
      _
    %v132 = vld [vmem:[%s0] sm:$0xff]
    %v133 = vld [vmem:[%s1] sm:$0xff]
    %v134 = vld [vmem:[#allocation2] sm:$0xff]
    %v135 = vld [vmem:[#allocation2 + $0x8] sm:$0xff]
    %v136 = vld [vmem:[#allocation2 + $0x10] sm:$0xff]
    %v137 = vld [vmem:[#allocation2 + $0x18] sm:$0xff]
    %v138 = vld [vmem:[#allocation2 + $0x20] sm:$0xff]
    %v139 = vld [vmem:[#allocation2 + $0x28] sm:$0xff]
    %v140 = vld [vmem:[#allocation2 + $0x30] sm:$0xff]
    %v141 = vld [vmem:[#allocation2 + $0x38] sm:$0xff]
    %v142 = vld [vmem:[#allocation2 + $0x40] sm:$0xff]
    %v143 = vld [vmem:[#allocation2 + $0x48] sm:$0xff]
    %v144 = vld [vmem:[#allocation2 + $0x50] sm:$0xff]
    %v145 = vld [vmem:[#allocation2 + $0x58] sm:$0xff]
    %v146 = vld [vmem:[#allocation2 + $0x60] sm:$0xff]
    %v147 = vld [vmem:[#allocation2 + $0x68] sm:$0xff]
    %v148 = vld [vmem:[#allocation2 + $0x70] sm:$0xff]
    %v149 = vld [vmem:[#allocation2 + $0x78] sm:$0xff]
    %v150 = vld [vmem:[%s3] sm:$0x1]
    %v152 = vlaneseq
    %v153 = vshrl.u32 %v152, 7
    %v154 = vsub.s32 0, %v153
    %v155 = vrot.slane %v150, %v154
    %157 = vmatprep.subr.mxu0 0.0
    %158 = vmatpush1.msra.mxu0 %v134
    %159 = vmatprep.subr.mxu0 0.0
    %160 = vmatpush1.msra.mxu0 %v135
    %161 = vmatprep.subr.mxu0 0.0
    %162 = vmatpush1.msra.mxu0 %v136
    %163 = vmatprep.subr.mxu0 0.0
    %164 = vmatpush1.msra.mxu0 %v137
    %165 = vmatprep.subr.mxu0 0.0
    %166 = vmatpush1.msra.mxu0 %v138
    %167 = vmatprep.subr.mxu0 0.0
    %168 = vmatpush1.msra.mxu0 %v139
    %169 = vmatprep.subr.mxu0 0.0
    %170 = vmatpush1.msra.mxu0 %v140
    %171 = vmatprep.subr.mxu0 0.0
    %172 = vmatpush1.msra.mxu0 %v141
    %173 = vmatprep.subr.mxu0 0.0
    %174 = vmatpush1.msra.mxu0 %v142
    %175 = vmatprep.subr.mxu0 0.0
    %176 = vmatpush1.msra.mxu0 %v143
    %177 = vmatprep.subr.mxu0 0.0
    %178 = vmatpush1.msra.mxu0 %v144
    %179 = vmatprep.subr.mxu0 0.0
    %180 = vmatpush1.msra.mxu0 %v145
    %181 = vmatprep.subr.mxu0 0.0
    %182 = vmatpush1.msra.mxu0 %v146
    %183 = vmatprep.subr.mxu0 0.0
    %184 = vmatpush1.msra.mxu0 %v147
    %185 = vmatprep.subr.mxu0 0.0
    %186 = vmatpush1.msra.mxu0 %v148
    %187 = vmatprep.subr.mxu0 0.0
    %188 = vmatpush1.msra.mxu0 %v149
    %189 = vmatprep.subr.mxu0 0.0
    %190 = vmatpush1.msra.mxu0 0.0
    %191 = vmatprep.subr.mxu0 0.0
    %192 = vmatpush1.msra.mxu0 0.0
    %193 = vmatprep.subr.mxu0 0.0
    %194 = vmatpush1.msra.mxu0 0.0
    %195 = vmatprep.subr.mxu0 0.0
    %196 = vmatpush1.msra.mxu0 0.0
    %197 = vmatprep.subr.mxu0 0.0
    %198 = vmatpush1.msra.mxu0 0.0
    %199 = vmatprep.subr.mxu0 0.0
    %200 = vmatpush1.msra.mxu0 0.0
    %201 = vmatprep.subr.mxu0 0.0
    %202 = vmatpush1.msra.mxu0 0.0
    %203 = vmatprep.subr.mxu0 0.0
    %204 = vmatpush1.msra.mxu0 0.0
    %205 = vmatprep.subr.mxu0 0.0
    %206 = vmatpush1.msra.mxu0 0.0
    %207 = vmatprep.subr.mxu0 0.0
    %208 = vmatpush1.msra.mxu0 0.0
    %209 = vmatprep.subr.mxu0 0.0
    %210 = vmatpush1.msra.mxu0 0.0
    %211 = vmatprep.subr.mxu0 0.0
    %212 = vmatpush1.msra.mxu0 0.0
    %213 = vmatprep.subr.mxu0 0.0
    %214 = vmatpush1.msra.mxu0 0.0
    %215 = vmatprep.subr.mxu0 0.0
    %216 = vmatpush1.msra.mxu0 0.0
    %217 = vmatprep.subr.mxu0 0.0
    %218 = vmatpush1.msra.mxu0 0.0
    %219 = vmatprep.subr.mxu0 0.0
    %220 = vmatpush1.msra.mxu0 0.0
    %221 = vmatprep.mubr.f32.mxu0 0.0
    %222 = vmatmul.mubr.f32.gmra.mrb[0].mxu0 %v132
    %v223 = vpop.f32.mrb[0].mxu0
    %v224 = vadd.f32 %v155, %v223
    %v225 = vpop.f32.mrb[0].mxu0
    %226 = vdwg.mxu0
    %v227 = vmax.f32 %v224, 0.0
    %v228 = vld [vmem:[#allocation5] sm:$0xff]
    %v229 = vld [vmem:[#allocation5 + $0x8] sm:$0xff]
    %v230 = vld [vmem:[#allocation5 + $0x10] sm:$0xff]
    %v231 = vld [vmem:[#allocation5 + $0x18] sm:$0xff]
    %v232 = vld [vmem:[#allocation5 + $0x20] sm:$0xff]
    %v233 = vld [vmem:[#allocation5 + $0x28] sm:$0xff]
    %v234 = vld [vmem:[#allocation5 + $0x30] sm:$0xff]
    %v235 = vld [vmem:[#allocation5 + $0x38] sm:$0xff]
    %v236 = vld [vmem:[#allocation5 + $0x40] sm:$0xff]
    %v237 = vld [vmem:[#allocation5 + $0x48] sm:$0xff]
    %v238 = vld [vmem:[#allocation5 + $0x50] sm:$0xff]
    %v239 = vld [vmem:[#allocation5 + $0x58] sm:$0xff]
    %v240 = vld [vmem:[#allocation5 + $0x60] sm:$0xff]
    %v241 = vld [vmem:[#allocation5 + $0x68] sm:$0xff]
    %v242 = vld [vmem:[#allocation5 + $0x70] sm:$0xff]
    %v243 = vld [vmem:[#allocation5 + $0x78] sm:$0xff]
    %v244 = vld [vmem:[%s5] sm:$0x1]
    %v246 = vlaneseq
    %v247 = vshrl.u32 %v246, 7
    %v248 = vsub.s32 0, %v247
    %v249 = vrot.slane %v244, %v248
    %251 = vmatprep.subr.mxu0 0.0
    %252 = vmatpush1.msra.mxu0 %v228
    %253 = vmatprep.subr.mxu0 0.0
    %254 = vmatpush1.msra.mxu0 %v229
    %255 = vmatprep.subr.mxu0 0.0
    %256 = vmatpush1.msra.mxu0 %v230
    %257 = vmatprep.subr.mxu0 0.0
    %258 = vmatpush1.msra.mxu0 %v231
    %259 = vmatprep.subr.mxu0 0.0
    %260 = vmatpush1.msra.mxu0 %v232
    %261 = vmatprep.subr.mxu0 0.0
    %262 = vmatpush1.msra.mxu0 %v233
    %263 = vmatprep.subr.mxu0 0.0
    %264 = vmatpush1.msra.mxu0 %v234
    %265 = vmatprep.subr.mxu0 0.0
    %266 = vmatpush1.msra.mxu0 %v235
    %267 = vmatprep.subr.mxu0 0.0
    %268 = vmatpush1.msra.mxu0 %v236
    %269 = vmatprep.subr.mxu0 0.0
    %270 = vmatpush1.msra.mxu0 %v237
    %271 = vmatprep.subr.mxu0 0.0
    %272 = vmatpush1.msra.mxu0 %v238
    %273 = vmatprep.subr.mxu0 0.0
    %274 = vmatpush1.msra.mxu0 %v239
    %275 = vmatprep.subr.mxu0 0.0
    %276 = vmatpush1.msra.mxu0 %v240
    %277 = vmatprep.subr.mxu0 0.0
    %278 = vmatpush1.msra.mxu0 %v241
    %279 = vmatprep.subr.mxu0 0.0
    %280 = vmatpush1.msra.mxu0 %v242
    %281 = vmatprep.subr.mxu0 0.0
    %282 = vmatpush1.msra.mxu0 %v243
    %283 = vmatprep.subr.mxu0 0.0
    %284 = vmatpush1.msra.mxu0 0.0
    %285 = vmatprep.subr.mxu0 0.0
    %286 = vmatpush1.msra.mxu0 0.0
    %287 = vmatprep.subr.mxu0 0.0
    %288 = vmatpush1.msra.mxu0 0.0
    %289 = vmatprep.subr.mxu0 0.0
    %290 = vmatpush1.msra.mxu0 0.0
    %291 = vmatprep.subr.mxu0 0.0
    %292 = vmatpush1.msra.mxu0 0.0
    %293 = vmatprep.subr.mxu0 0.0
    %294 = vmatpush1.msra.mxu0 0.0
    %295 = vmatprep.subr.mxu0 0.0
    %296 = vmatpush1.msra.mxu0 0.0
    %297 = vmatprep.subr.mxu0 0.0
    %298 = vmatpush1.msra.mxu0 0.0
    %299 = vmatprep.subr.mxu0 0.0
    %300 = vmatpush1.msra.mxu0 0.0
    %301 = vmatprep.subr.mxu0 0.0
    %302 = vmatpush1.msra.mxu0 0.0
    %303 = vmatprep.subr.mxu0 0.0
    %304 = vmatpush1.msra.mxu0 0.0
    %305 = vmatprep.subr.mxu0 0.0
    %306 = vmatpush1.msra.mxu0 0.0
    %307 = vmatprep.subr.mxu0 0.0
    %308 = vmatpush1.msra.mxu0 0.0
    %309 = vmatprep.subr.mxu0 0.0
    %310 = vmatpush1.msra.mxu0 0.0
    %311 = vmatprep.subr.mxu0 0.0
    %312 = vmatpush1.msra.mxu0 0.0
    %313 = vmatprep.subr.mxu0 0.0
    %314 = vmatpush1.msra.mxu0 0.0
    %315 = vmatprep.mubr.f32.mxu0 0.0
    %316 = vmatmul.mubr.f32.gmra.mrb[0].mxu0 %v227
    %v317 = vpop.f32.mrb[0].mxu0
    %v318 = vadd.f32 %v249, %v317
    %v319 = vpop.f32.mrb[0].mxu0
    %320 = vdwg.mxu0
    %v321 = vmax.f32 %v318, 0.0
    %v322 = vld [vmem:[#allocation7] sm:$0xff]
    %v323 = vld [vmem:[#allocation7 + $0x8] sm:$0xff]
    %v324 = vld [vmem:[#allocation7 + $0x10] sm:$0xff]
    %v325 = vld [vmem:[#allocation7 + $0x18] sm:$0xff]
    %v326 = vld [vmem:[#allocation7 + $0x20] sm:$0xff]
    %v327 = vld [vmem:[#allocation7 + $0x28] sm:$0xff]
    %v328 = vld [vmem:[#allocation7 + $0x30] sm:$0xff]
    %v329 = vld [vmem:[#allocation7 + $0x38] sm:$0xff]
    %v330 = vld [vmem:[#allocation7 + $0x40] sm:$0xff]
    %v331 = vld [vmem:[#allocation7 + $0x48] sm:$0xff]
    %v332 = vld [vmem:[#allocation7 + $0x50] sm:$0xff]
    %v333 = vld [vmem:[#allocation7 + $0x58] sm:$0xff]
    %v334 = vld [vmem:[#allocation7 + $0x60] sm:$0xff]
    %v335 = vld [vmem:[#allocation7 + $0x68] sm:$0xff]
    %v336 = vld [vmem:[#allocation7 + $0x70] sm:$0xff]
    %v337 = vld [vmem:[#allocation7 + $0x78] sm:$0xff]
    %v338 = vld [vmem:[#allocation7 + $0x80] sm:$0xff]
    %v339 = vld [vmem:[#allocation7 + $0x88] sm:$0xff]
    %v340 = vld [vmem:[#allocation7 + $0x90] sm:$0xff]
    %v341 = vld [vmem:[#allocation7 + $0x98] sm:$0xff]
    %v342 = vld [vmem:[#allocation7 + $0xa0] sm:$0xff]
    %v343 = vld [vmem:[#allocation7 + $0xa8] sm:$0xff]
    %v344 = vld [vmem:[#allocation7 + $0xb0] sm:$0xff]
    %v345 = vld [vmem:[#allocation7 + $0xb8] sm:$0xff]
    %v346 = vld [vmem:[#allocation7 + $0xc0] sm:$0xff]
    %v347 = vld [vmem:[#allocation7 + $0xc8] sm:$0xff]
    %v348 = vld [vmem:[#allocation7 + $0xd0] sm:$0xff]
    %v349 = vld [vmem:[#allocation7 + $0xd8] sm:$0xff]
    %v350 = vld [vmem:[#allocation7 + $0xe0] sm:$0xff]
    %v351 = vld [vmem:[#allocation7 + $0xe8] sm:$0xff]
    %v352 = vld [vmem:[#allocation7 + $0xf0] sm:$0xff]
    %v353 = vld [vmem:[#allocation7 + $0xf8] sm:$0xff]
    %v354 = vld [vmem:[%s7] sm:$0x3]
    %v356 = vlaneseq
    %v357 = vshrl.u32 %v356, 7
    %v358 = vsub.s32 0, %v357
    %v359 = vrot.slane %v354, %v358
    %v360 = vlaneseq
    %v361 = vshrl.u32 %v360, 7
    %v362 = vsub.s32 1, %v361
    %v363 = vrot.slane %v354, %v362
    %366 = vmatprep.subr.mxu0 %v323
    %367 = vmatpush1.msra.mxu0 %v322
    %368 = vmatprep.subr.mxu0 %v325
    %369 = vmatpush1.msra.mxu0 %v324
    %370 = vmatprep.subr.mxu0 %v327
    %371 = vmatpush1.msra.mxu0 %v326
    %372 = vmatprep.subr.mxu0 %v329
    %373 = vmatpush1.msra.mxu0 %v328
    %374 = vmatprep.subr.mxu0 %v331
    %375 = vmatpush1.msra.mxu0 %v330
    %376 = vmatprep.subr.mxu0 %v333
    %377 = vmatpush1.msra.mxu0 %v332
    %378 = vmatprep.subr.mxu0 %v335
    %379 = vmatpush1.msra.mxu0 %v334
    %380 = vmatprep.subr.mxu0 %v337
    %381 = vmatpush1.msra.mxu0 %v336
    %382 = vmatprep.subr.mxu0 %v339
    %383 = vmatpush1.msra.mxu0 %v338
    %384 = vmatprep.subr.mxu0 %v341
    %385 = vmatpush1.msra.mxu0 %v340
    %386 = vmatprep.subr.mxu0 %v343
    %387 = vmatpush1.msra.mxu0 %v342
    %388 = vmatprep.subr.mxu0 %v345
    %389 = vmatpush1.msra.mxu0 %v344
    %390 = vmatprep.subr.mxu0 %v347
    %391 = vmatpush1.msra.mxu0 %v346
    %392 = vmatprep.subr.mxu0 %v349
    %393 = vmatpush1.msra.mxu0 %v348
    %394 = vmatprep.subr.mxu0 %v351
    %395 = vmatpush1.msra.mxu0 %v350
    %396 = vmatprep.subr.mxu0 %v353
    %397 = vmatpush1.msra.mxu0 %v352
    %398 = vmatprep.subr.mxu0 0.0
    %399 = vmatpush1.msra.mxu0 0.0
    %400 = vmatprep.subr.mxu0 0.0
    %401 = vmatpush1.msra.mxu0 0.0
    %402 = vmatprep.subr.mxu0 0.0
    %403 = vmatpush1.msra.mxu0 0.0
    %404 = vmatprep.subr.mxu0 0.0
    %405 = vmatpush1.msra.mxu0 0.0
    %406 = vmatprep.subr.mxu0 0.0
    %407 = vmatpush1.msra.mxu0 0.0
    %408 = vmatprep.subr.mxu0 0.0
    %409 = vmatpush1.msra.mxu0 0.0
    %410 = vmatprep.subr.mxu0 0.0
    %411 = vmatpush1.msra.mxu0 0.0
    %412 = vmatprep.subr.mxu0 0.0
    %413 = vmatpush1.msra.mxu0 0.0
    %414 = vmatprep.subr.mxu0 0.0
    %415 = vmatpush1.msra.mxu0 0.0
    %416 = vmatprep.subr.mxu0 0.0
    %417 = vmatpush1.msra.mxu0 0.0
    %418 = vmatprep.subr.mxu0 0.0
    %419 = vmatpush1.msra.mxu0 0.0
    %420 = vmatprep.subr.mxu0 0.0
    %421 = vmatpush1.msra.mxu0 0.0
    %422 = vmatprep.subr.mxu0 0.0
    %423 = vmatpush1.msra.mxu0 0.0
    %424 = vmatprep.subr.mxu0 0.0
    %425 = vmatpush1.msra.mxu0 0.0
    %426 = vmatprep.subr.mxu0 0.0
    %427 = vmatpush1.msra.mxu0 0.0
    %428 = vmatprep.subr.mxu0 0.0
    %429 = vmatpush1.msra.mxu0 0.0
    %430 = vmatprep.mubr.f32.mxu0 0.0
    %431 = vmatmul.mubr.f32.gmra.mrb[0].mxu0 %v321
    %v432 = vpop.f32.mrb[0].mxu0
    %v433 = vadd.f32 %v359, %v432
    %v434 = vpop.f32.mrb[0].mxu0
    %v435 = vadd.f32 %v363, %v434
    %436 = vdwg.mxu0
    %437 = vst [vmem:[%s15] sm:$0xff] %v433
    %438 = vst [vmem:[%s15 + $0x8] sm:$0xff] %v435
    %v439 = vmul.f32 %v435, 0.5
    %v440 = vmul.f32 %v439, 1.442695
    %v441 = vpow.pop %v440
    %v442 = vmul.f32 %v441, %v133
    %v443 = vadd.f32 %v433, %v442
    %v444 = vld [vmem:[#allocation8] sm:$0xff]
    %v445 = vld [vmem:[#allocation8 + $0x8] sm:$0xff]
    %v446 = vld [vmem:[#allocation8 + $0x10] sm:$0xff]
    %v447 = vld [vmem:[#allocation8 + $0x18] sm:$0xff]
    %v448 = vld [vmem:[#allocation8 + $0x20] sm:$0xff]
    %v449 = vld [vmem:[#allocation8 + $0x28] sm:$0xff]
    %v450 = vld [vmem:[#allocation8 + $0x30] sm:$0xff]
    %v451 = vld [vmem:[#allocation8 + $0x38] sm:$0xff]
    %v452 = vld [vmem:[#allocation8 + $0x40] sm:$0xff]
    %v453 = vld [vmem:[#allocation8 + $0x48] sm:$0xff]
    %v454 = vld [vmem:[#allocation8 + $0x50] sm:$0xff]
    %v455 = vld [vmem:[#allocation8 + $0x58] sm:$0xff]
    %v456 = vld [vmem:[#allocation8 + $0x60] sm:$0xff]
    %v457 = vld [vmem:[#allocation8 + $0x68] sm:$0xff]
    %v458 = vld [vmem:[#allocation8 + $0x70] sm:$0xff]
    %v459 = vld [vmem:[#allocation8 + $0x78] sm:$0xff]
    %v460 = vld [vmem:[%s9] sm:$0x1]
    %v462 = vlaneseq
    %v463 = vshrl.u32 %v462, 7
    %v464 = vsub.s32 0, %v463
    %v465 = vrot.slane %v460, %v464
    %467 = vmatprep.subr.mxu0 0.0
    %468 = vmatpush1.msra.mxu0 %v444
    %469 = vmatprep.subr.mxu0 0.0
    %470 = vmatpush1.msra.mxu0 %v445
    %471 = vmatprep.subr.mxu0 0.0
    %472 = vmatpush1.msra.mxu0 %v446
    %473 = vmatprep.subr.mxu0 0.0
    %474 = vmatpush1.msra.mxu0 %v447
    %475 = vmatprep.subr.mxu0 0.0
    %476 = vmatpush1.msra.mxu0 %v448
    %477 = vmatprep.subr.mxu0 0.0
    %478 = vmatpush1.msra.mxu0 %v449
    %479 = vmatprep.subr.mxu0 0.0
    %480 = vmatpush1.msra.mxu0 %v450
    %481 = vmatprep.subr.mxu0 0.0
    %482 = vmatpush1.msra.mxu0 %v451
    %483 = vmatprep.subr.mxu0 0.0
    %484 = vmatpush1.msra.mxu0 %v452
    %485 = vmatprep.subr.mxu0 0.0
    %486 = vmatpush1.msra.mxu0 %v453
    %487 = vmatprep.subr.mxu0 0.0
    %488 = vmatpush1.msra.mxu0 %v454
    %489 = vmatprep.subr.mxu0 0.0
    %490 = vmatpush1.msra.mxu0 %v455
    %491 = vmatprep.subr.mxu0 0.0
    %492 = vmatpush1.msra.mxu0 %v456
    %493 = vmatprep.subr.mxu0 0.0
    %494 = vmatpush1.msra.mxu0 %v457
    %495 = vmatprep.subr.mxu0 0.0
    %496 = vmatpush1.msra.mxu0 %v458
    %497 = vmatprep.subr.mxu0 0.0
    %498 = vmatpush1.msra.mxu0 %v459
    %499 = vmatprep.subr.mxu0 0.0
    %500 = vmatpush1.msra.mxu0 0.0
    %501 = vmatprep.subr.mxu0 0.0
    %502 = vmatpush1.msra.mxu0 0.0
    %503 = vmatprep.subr.mxu0 0.0
    %504 = vmatpush1.msra.mxu0 0.0
    %505 = vmatprep.subr.mxu0 0.0
    %506 = vmatpush1.msra.mxu0 0.0
    %507 = vmatprep.subr.mxu0 0.0
    %508 = vmatpush1.msra.mxu0 0.0
    %509 = vmatprep.subr.mxu0 0.0
    %510 = vmatpush1.msra.mxu0 0.0
    %511 = vmatprep.subr.mxu0 0.0
    %512 = vmatpush1.msra.mxu0 0.0
    %513 = vmatprep.subr.mxu0 0.0
    %514 = vmatpush1.msra.mxu0 0.0
    %515 = vmatprep.subr.mxu0 0.0
    %516 = vmatpush1.msra.mxu0 0.0
    %517 = vmatprep.subr.mxu0 0.0
    %518 = vmatpush1.msra.mxu0 0.0
    %519 = vmatprep.subr.mxu0 0.0
    %520 = vmatpush1.msra.mxu0 0.0
    %521 = vmatprep.subr.mxu0 0.0
    %522 = vmatpush1.msra.mxu0 0.0
    %523 = vmatprep.subr.mxu0 0.0
    %524 = vmatpush1.msra.mxu0 0.0
    %525 = vmatprep.subr.mxu0 0.0
    %526 = vmatpush1.msra.mxu0 0.0
    %527 = vmatprep.subr.mxu0 0.0
    %528 = vmatpush1.msra.mxu0 0.0
    %529 = vmatprep.subr.mxu0 0.0
    %530 = vmatpush1.msra.mxu0 0.0
    %531 = vmatprep.mubr.f32.mxu0 0.0
    %532 = vmatmul.mubr.f32.gmra.mrb[0].mxu0 %v443
    %v533 = vpop.f32.mrb[0].mxu0
    %v534 = vadd.f32 %v465, %v533
    %v535 = vpop.f32.mrb[0].mxu0
    %536 = vdwg.mxu0
    %v537 = vmax.f32 %v534, 0.0
    %v538 = vld [vmem:[#allocation10] sm:$0xff]
    %v539 = vld [vmem:[#allocation10 + $0x8] sm:$0xff]
    %v540 = vld [vmem:[#allocation10 + $0x10] sm:$0xff]
    %v541 = vld [vmem:[#allocation10 + $0x18] sm:$0xff]
    %v542 = vld [vmem:[#allocation10 + $0x20] sm:$0xff]
    %v543 = vld [vmem:[#allocation10 + $0x28] sm:$0xff]
    %v544 = vld [vmem:[#allocation10 + $0x30] sm:$0xff]
    %v545 = vld [vmem:[#allocation10 + $0x38] sm:$0xff]
    %v546 = vld [vmem:[#allocation10 + $0x40] sm:$0xff]
    %v547 = vld [vmem:[#allocation10 + $0x48] sm:$0xff]
    %v548 = vld [vmem:[#allocation10 + $0x50] sm:$0xff]
    %v549 = vld [vmem:[#allocation10 + $0x58] sm:$0xff]
    %v550 = vld [vmem:[#allocation10 + $0x60] sm:$0xff]
    %v551 = vld [vmem:[#allocation10 + $0x68] sm:$0xff]
    %v552 = vld [vmem:[#allocation10 + $0x70] sm:$0xff]
    %v553 = vld [vmem:[#allocation10 + $0x78] sm:$0xff]
    %v554 = vld [vmem:[%s11] sm:$0x1]
    %v556 = vlaneseq
    %v557 = vshrl.u32 %v556, 7
    %v558 = vsub.s32 0, %v557
    %v559 = vrot.slane %v554, %v558
    %561 = vmatprep.subr.mxu0 0.0
    %562 = vmatpush1.msra.mxu0 %v538
    %563 = vmatprep.subr.mxu0 0.0
    %564 = vmatpush1.msra.mxu0 %v539
    %565 = vmatprep.subr.mxu0 0.0
    %566 = vmatpush1.msra.mxu0 %v540
    %567 = vmatprep.subr.mxu0 0.0
    %568 = vmatpush1.msra.mxu0 %v541
    %569 = vmatprep.subr.mxu0 0.0
    %570 = vmatpush1.msra.mxu0 %v542
    %571 = vmatprep.subr.mxu0 0.0
    %572 = vmatpush1.msra.mxu0 %v543
    %573 = vmatprep.subr.mxu0 0.0
    %574 = vmatpush1.msra.mxu0 %v544
    %575 = vmatprep.subr.mxu0 0.0
    %576 = vmatpush1.msra.mxu0 %v545
    %577 = vmatprep.subr.mxu0 0.0
    %578 = vmatpush1.msra.mxu0 %v546
    %579 = vmatprep.subr.mxu0 0.0
    %580 = vmatpush1.msra.mxu0 %v547
    %581 = vmatprep.subr.mxu0 0.0
    %582 = vmatpush1.msra.mxu0 %v548
    %583 = vmatprep.subr.mxu0 0.0
    %584 = vmatpush1.msra.mxu0 %v549
    %585 = vmatprep.subr.mxu0 0.0
    %586 = vmatpush1.msra.mxu0 %v550
    %587 = vmatprep.subr.mxu0 0.0
    %588 = vmatpush1.msra.mxu0 %v551
    %589 = vmatprep.subr.mxu0 0.0
    %590 = vmatpush1.msra.mxu0 %v552
    %591 = vmatprep.subr.mxu0 0.0
    %592 = vmatpush1.msra.mxu0 %v553
    %593 = vmatprep.subr.mxu0 0.0
    %594 = vmatpush1.msra.mxu0 0.0
    %595 = vmatprep.subr.mxu0 0.0
    %596 = vmatpush1.msra.mxu0 0.0
    %597 = vmatprep.subr.mxu0 0.0
    %598 = vmatpush1.msra.mxu0 0.0
    %599 = vmatprep.subr.mxu0 0.0
    %600 = vmatpush1.msra.mxu0 0.0
    %601 = vmatprep.subr.mxu0 0.0
    %602 = vmatpush1.msra.mxu0 0.0
    %603 = vmatprep.subr.mxu0 0.0
    %604 = vmatpush1.msra.mxu0 0.0
    %605 = vmatprep.subr.mxu0 0.0
    %606 = vmatpush1.msra.mxu0 0.0
    %607 = vmatprep.subr.mxu0 0.0
    %608 = vmatpush1.msra.mxu0 0.0
    %609 = vmatprep.subr.mxu0 0.0
    %610 = vmatpush1.msra.mxu0 0.0
    %611 = vmatprep.subr.mxu0 0.0
    %612 = vmatpush1.msra.mxu0 0.0
    %613 = vmatprep.subr.mxu0 0.0
    %614 = vmatpush1.msra.mxu0 0.0
    %615 = vmatprep.subr.mxu0 0.0
    %616 = vmatpush1.msra.mxu0 0.0
    %617 = vmatprep.subr.mxu0 0.0
    %618 = vmatpush1.msra.mxu0 0.0
    %619 = vmatprep.subr.mxu0 0.0
    %620 = vmatpush1.msra.mxu0 0.0
    %621 = vmatprep.subr.mxu0 0.0
    %622 = vmatpush1.msra.mxu0 0.0
    %623 = vmatprep.subr.mxu0 0.0
    %624 = vmatpush1.msra.mxu0 0.0
    %625 = vmatprep.mubr.f32.mxu0 0.0
    %626 = vmatmul.mubr.f32.gmra.mrb[0].mxu0 %v537
    %v627 = vpop.f32.mrb[0].mxu0
    %v628 = vadd.f32 %v559, %v627
    %v629 = vpop.f32.mrb[0].mxu0
    %630 = vdwg.mxu0
    %v631 = vmax.f32 %v628, 0.0
    %v632 = vld [vmem:[#allocation11] sm:$0xff]
    %v633 = vld [vmem:[#allocation11 + $0x8] sm:$0xff]
    %v634 = vld [vmem:[#allocation11 + $0x10] sm:$0xff]
    %v635 = vld [vmem:[#allocation11 + $0x18] sm:$0xff]
    %v636 = vld [vmem:[#allocation11 + $0x20] sm:$0xff]
    %v637 = vld [vmem:[#allocation11 + $0x28] sm:$0xff]
    %v638 = vld [vmem:[#allocation11 + $0x30] sm:$0xff]
    %v639 = vld [vmem:[#allocation11 + $0x38] sm:$0xff]
    %v640 = vld [vmem:[#allocation11 + $0x40] sm:$0xff]
    %v641 = vld [vmem:[#allocation11 + $0x48] sm:$0xff]
    %v642 = vld [vmem:[#allocation11 + $0x50] sm:$0xff]
    %v643 = vld [vmem:[#allocation11 + $0x58] sm:$0xff]
    %v644 = vld [vmem:[#allocation11 + $0x60] sm:$0xff]
    %v645 = vld [vmem:[#allocation11 + $0x68] sm:$0xff]
    %v646 = vld [vmem:[#allocation11 + $0x70] sm:$0xff]
    %v647 = vld [vmem:[#allocation11 + $0x78] sm:$0xff]
    %v648 = vld [vmem:[%s13] sm:$0x1]
    %v650 = vlaneseq
    %v651 = vshrl.u32 %v650, 7
    %v652 = vsub.s32 0, %v651
    %v653 = vrot.slane %v648, %v652
    %655 = vmatprep.subr.mxu0 0.0
    %656 = vmatpush1.msra.mxu0 %v632
    %657 = vmatprep.subr.mxu0 0.0
    %658 = vmatpush1.msra.mxu0 %v633
    %659 = vmatprep.subr.mxu0 0.0
    %660 = vmatpush1.msra.mxu0 %v634
    %661 = vmatprep.subr.mxu0 0.0
    %662 = vmatpush1.msra.mxu0 %v635
    %663 = vmatprep.subr.mxu0 0.0
    %664 = vmatpush1.msra.mxu0 %v636
    %665 = vmatprep.subr.mxu0 0.0
    %666 = vmatpush1.msra.mxu0 %v637
    %667 = vmatprep.subr.mxu0 0.0
    %668 = vmatpush1.msra.mxu0 %v638
    %669 = vmatprep.subr.mxu0 0.0
    %670 = vmatpush1.msra.mxu0 %v639
    %671 = vmatprep.subr.mxu0 0.0
    %672 = vmatpush1.msra.mxu0 %v640
    %673 = vmatprep.subr.mxu0 0.0
    %674 = vmatpush1.msra.mxu0 %v641
    %675 = vmatprep.subr.mxu0 0.0
    %676 = vmatpush1.msra.mxu0 %v642
    %677 = vmatprep.subr.mxu0 0.0
    %678 = vmatpush1.msra.mxu0 %v643
    %679 = vmatprep.subr.mxu0 0.0
    %680 = vmatpush1.msra.mxu0 %v644
    %681 = vmatprep.subr.mxu0 0.0
    %682 = vmatpush1.msra.mxu0 %v645
    %683 = vmatprep.subr.mxu0 0.0
    %684 = vmatpush1.msra.mxu0 %v646
    %685 = vmatprep.subr.mxu0 0.0
    %686 = vmatpush1.msra.mxu0 %v647
    %687 = vmatprep.subr.mxu0 0.0
    %688 = vmatpush1.msra.mxu0 0.0
    %689 = vmatprep.subr.mxu0 0.0
    %690 = vmatpush1.msra.mxu0 0.0
    %691 = vmatprep.subr.mxu0 0.0
    %692 = vmatpush1.msra.mxu0 0.0
    %693 = vmatprep.subr.mxu0 0.0
    %694 = vmatpush1.msra.mxu0 0.0
    %695 = vmatprep.subr.mxu0 0.0
    %696 = vmatpush1.msra.mxu0 0.0
    %697 = vmatprep.subr.mxu0 0.0
    %698 = vmatpush1.msra.mxu0 0.0
    %699 = vmatprep.subr.mxu0 0.0
    %700 = vmatpush1.msra.mxu0 0.0
    %701 = vmatprep.subr.mxu0 0.0
    %702 = vmatpush1.msra.mxu0 0.0
    %703 = vmatprep.subr.mxu0 0.0
    %704 = vmatpush1.msra.mxu0 0.0
    %705 = vmatprep.subr.mxu0 0.0
    %706 = vmatpush1.msra.mxu0 0.0
    %707 = vmatprep.subr.mxu0 0.0
    %708 = vmatpush1.msra.mxu0 0.0
    %709 = vmatprep.subr.mxu0 0.0
    %710 = vmatpush1.msra.mxu0 0.0
    %711 = vmatprep.subr.mxu0 0.0
    %712 = vmatpush1.msra.mxu0 0.0
    %713 = vmatprep.subr.mxu0 0.0
    %714 = vmatpush1.msra.mxu0 0.0
    %715 = vmatprep.subr.mxu0 0.0
    %716 = vmatpush1.msra.mxu0 0.0
    %717 = vmatprep.subr.mxu0 0.0
    %718 = vmatpush1.msra.mxu0 0.0
    %719 = vmatprep.mubr.f32.mxu0 0.0
    %720 = vmatmul.mubr.f32.gmra.mrb[0].mxu0 %v631
    %v721 = vpop.f32.mrb[0].mxu0
    %v722 = vadd.f32 %v653, %v721
    %v723 = vpop.f32.mrb[0].mxu0
    %724 = vdwg.mxu0
    %725 = vst [vmem:[#allocation13] sm:$0xff] %v722
    // Predicated region
    $region82: #{_forward_impl.1} parent=1 // pred_check
      _
    $region83: #{_forward_impl.1} parent=1 // pred_check_branch
      %727 = sbr.rel (0) target = $region85
    $region84: #{_forward_impl.1} parent=1 // pred_region
      %s729 = ssub.s32 128, 128
      %730 = vsyncadd [#allocation4], %s729
      %s732 = sshll.u32 [#allocation13], 4
      %s733 = int_to_ptr.vmem [resolvable:$true] %s732
      %735 = dma.vmem_to_hbm [thread:$0]  %s733, 128, %s14, [#allocation4]
    $region85: #{_forward_impl.1} parent=1 // pred_fallthru
      _
    // Predicated region
    $region86: #{_forward_impl.1} parent=1 // pred_check
      _
    $region87: #{_forward_impl.1} parent=1 // pred_check_branch
      %737 = sbr.rel (0) target = $region89
    $region88: #{_forward_impl.1} parent=1 // pred_region
      _
    $region89: #{_forward_impl.1} parent=1 // pred_fallthru
      _
    // Predicated region
    $region90: #{_forward_impl.1} parent=1 // pred_check
      _
    $region91: #{_forward_impl.1} parent=1 // pred_check_branch
      %739 = sbr.rel (0) target = $region93
    $region92: #{_forward_impl.1} parent=1 // pred_region
      %740 = dma.done [#allocation4], 128
    $region93: #{_forward_impl.1} parent=1 // pred_fallthru
      _
    // Predicated region
    $region94: #{_forward_impl.1} parent=1 // pred_check
      _
    $region95: #{_forward_impl.1} parent=1 // pred_check_branch
      %742 = sbr.rel (0) target = $region97
    $region96: #{_forward_impl.1} parent=1 // pred_region
      _
    $region97: #{_forward_impl.1} parent=1 // pred_fallthru
      _
    %743 = vsyncpa [#allocation3], 1
    %744 = vsyncpa [#allocation6], 1
    %745 = vsyncpa [#allocation9], 1
    %746 = vsyncpa [#allocation12], 1
    %747 = vsyncpa [#allocation4], 1

</llo_original>
